<compile_context>
chip_gen: v7x
topology: tpu7x:2x2x1
jax: 0.10.0
libtpu: 0.0.40
codegen_flags: <defaults>
</compile_context>

<pallas_src>
import functools

import jax
import jax.numpy as jnp
from jax.experimental import pallas as pl
from jax.experimental.pallas import tpu as pltpu


def _se_kernel(x_ref, w1_ref, b1_ref, w2_ref, b2_ref, o_ref, *, inv_hw):
    # x_ref, o_ref : (C, HWp)  -- one sample (batch dim squeezed out)
    # w1_ref: (Cr, C)  b1_ref: (Cr, 1)  w2_ref: (C, Cr)  b2_ref: (C, 1)

    # --- squeeze: global average pool over the (zero-padded) lane axis ---
    pooled = jnp.sum(x_ref[...].astype(jnp.float32), axis=-1, keepdims=True) * inv_hw  # (C, 1)

    # --- excitation MLP: Linear -> Mish -> Linear -> Sigmoid (tiny, off critical path) ---
    h = jnp.dot(w1_ref[...], pooled, preferred_element_type=jnp.float32) + b1_ref[...]  # (Cr, 1)
    h = h * jnp.tanh(jnp.logaddexp(h, 0.0))        # Mish; logaddexp(h, 0) = stable softplus
    y = jnp.dot(w2_ref[...], h, preferred_element_type=jnp.float32) + b2_ref[...]       # (C, 1)
    y = jax.nn.sigmoid(y)

    # --- scale: reload x from VMEM (splits the live range) and gate per channel ---
    o_ref[...] = (x_ref[...].astype(jnp.float32) * y).astype(o_ref.dtype)


def se_block(x, w1, b1, w2, b2):
    """x: (B, C, H, W).  w1: (Cr, C), b1: (Cr,), w2: (C, Cr), b2: (C,)  (PyTorch (out,in) layout)."""
    B, C, H, W = x.shape
    Cr = w1.shape[0]
    HW = H * W
    HWp = ((HW + 127) // 128) * 128            # lane-dense output (multiple of 128)

    x_flat = x.reshape(B, C, HW)
    if HWp != HW:
        x_flat = jnp.pad(x_flat, ((0, 0), (0, 0), (0, HWp - HW)))

    b1c = b1.reshape(Cr, 1)
    b2c = b2.reshape(C, 1)

    # Per-step VMEM: double-buffered x block + double-buffered out block + weights.
    blk_bytes = C * HWp * x.dtype.itemsize
    vmem_need = 4 * blk_bytes + 4 * (w1.size + w2.size + Cr + C) + (1 << 20)
    vmem_limit = None
    if vmem_need > (16 << 20):                 # above the smallest (v5e) default scoped limit
        # TODO(synk): for per-sample slabs beyond ~half of v7x's 64 MiB VMEM, split HW onto
        # a second grid axis with a two-pass (pool, then scale) structure instead.
        vmem_limit = min(int(vmem_need * 5 // 4), 100 << 20)

    kernel = functools.partial(_se_kernel, inv_hw=1.0 / HW)

    out_flat = pl.pallas_call(
        kernel,
        out_shape=jax.ShapeDtypeStruct((B, C, HWp), x.dtype),
        grid=(B,),
        in_specs=[
            pl.BlockSpec((None, C, HWp), lambda b: (b, 0, 0)),   # x: one sample per step
            pl.BlockSpec((Cr, C), lambda b: (0, 0)),             # w1: VMEM-resident
            pl.BlockSpec((Cr, 1), lambda b: (0, 0)),             # b1
            pl.BlockSpec((C, Cr), lambda b: (0, 0)),             # w2
            pl.BlockSpec((C, 1), lambda b: (0, 0)),              # b2
        ],
        out_specs=pl.BlockSpec((None, C, HWp), lambda b: (b, 0, 0)),
        compiler_params=pltpu.CompilerParams(
            dimension_semantics=("parallel",),
            vmem_limit_bytes=vmem_limit,
        ),
    )(x_flat, w1, b1c, w2, b2c)

    if HWp != HW:
        out_flat = out_flat[:, :, :HW]
    return out_flat.reshape(B, C, H, W)


def init_params(key, in_channels, reduction=4):
    """Deterministic synthetic params with nn.Linear's (out, in) layout & init bounds."""
    cr = in_channels // reduction
    k1, k2, k3, k4 = jax.random.split(key, 4)
    bound1 = 1.0 / jnp.sqrt(in_channels)
    bound2 = 1.0 / jnp.sqrt(cr)
    w1 = jax.random.uniform(k1, (cr, in_channels), jnp.float32, -bound1, bound1)
    b1 = jax.random.uniform(k2, (cr,), jnp.float32, -bound1, bound1)
    w2 = jax.random.uniform(k3, (in_channels, cr), jnp.float32, -bound2, bound2)
    b2 = jax.random.uniform(k4, (in_channels,), jnp.float32, -bound2, bound2)
    return w1, b1, w2, b2


def se_block_ref(x, w1, b1, w2, b2):
    """Pure-JAX reference (matches the PyTorch module)."""
    pooled = jnp.mean(x, axis=(2, 3))                    # (B, C)
    h = pooled @ w1.T + b1
    h = h * jnp.tanh(jax.nn.softplus(h))
    y = jax.nn.sigmoid(h @ w2.T + b2)                    # (B, C)
    return x * y[:, :, None, None]


if __name__ == "__main__":
    B, C, H, W = 2, 4, 16, 16
    key = jax.random.PRNGKey(0)
    kx, kp = jax.random.split(key)
    x = jax.random.normal(kx, (B, C, H, W), jnp.float32)
    w1, b1, w2, b2 = init_params(kp, C, reduction=4)

    out = se_block(x, w1, b1, w2, b2)
    out = jax.block_until_ready(out)

    ref = se_block_ref(x, w1, b1, w2, b2)
    assert out.shape == (B, C, H, W)
    assert jnp.allclose(out, ref, atol=1e-5, rtol=1e-5)
    print("KERNEL_OK")
</pallas_src>

<mosaic_0001>
module attributes {stable_mosaic.version = 11 : i64} {
  func.func @_se_kernel(%arg0: i32, %arg1: memref<1x4x256xf32, #tpu.memory_space<vmem>>, %arg2: memref<1x4xf32, #tpu.memory_space<vmem>>, %arg3: memref<1x1xf32, #tpu.memory_space<vmem>>, %arg4: memref<4x1xf32, #tpu.memory_space<vmem>>, %arg5: memref<4x1xf32, #tpu.memory_space<vmem>>, %arg6: memref<1x4x256xf32, #tpu.memory_space<vmem>>) attributes {dimension_semantics = [#tpu.dimension_semantics<parallel>], iteration_bounds = array<i64: 2>, scalar_prefetch = 0 : i64, scratch_operands = 0 : i64, tpu.core_type = #tpu.core_type<tc>, window_params = [{transform_indices = @transform_0, window_bounds = array<i64: 1, 4, 256>}, {pipeline_mode = #tpu.pipeline_mode<synchronous>, transform_indices = @transform_1, window_bounds = array<i64: 1, 4>}, {pipeline_mode = #tpu.pipeline_mode<synchronous>, transform_indices = @transform_2, window_bounds = array<i64: 1, 1>}, {pipeline_mode = #tpu.pipeline_mode<synchronous>, transform_indices = @transform_3, window_bounds = array<i64: 4, 1>}, {pipeline_mode = #tpu.pipeline_mode<synchronous>, transform_indices = @transform_4, window_bounds = array<i64: 4, 1>}, {transform_indices = @transform_5, window_bounds = array<i64: 1, 4, 256>}]} {
    %c0 = arith.constant 0 : index
    %c0_0 = arith.constant 0 : index
    %c0_1 = arith.constant 0 : index
    %0 = vector.load %arg1[%c0, %c0_0, %c0_1] : memref<1x4x256xf32, #tpu.memory_space<vmem>>, vector<1x4x256xf32>
    %1 = vector.shape_cast %0 : vector<1x4x256xf32> to vector<4x256xf32>
    %cst = arith.constant dense<0.000000e+00> : vector<4xf32>
    %2 = vector.multi_reduction <add>, %1, %cst [1] : vector<4x256xf32> to vector<4xf32>
    %3 = vector.shape_cast %2 : vector<4xf32> to vector<4x1xf32>
    %cst_2 = arith.constant 3.906250e-03 : f32
    %4 = vector.broadcast %cst_2 : f32 to vector<4x1xf32>
    %5 = arith.mulf %3, %4 : vector<4x1xf32>
    %c0_3 = arith.constant 0 : index
    %c0_4 = arith.constant 0 : index
    %6 = vector.load %arg2[%c0_3, %c0_4] : memref<1x4xf32, #tpu.memory_space<vmem>>, vector<1x4xf32>
    %cst_5 = arith.constant dense<0.000000e+00> : vector<1x1xf32>
    %7 = tpu.matmul %6, %5, %cst_5 {dimension_numbers = #tpu.dot_dimension_numbers<[1], [0], [0], [1], [0, 0, 1, 1], [], []>} : vector<1x4xf32>, vector<4x1xf32>, vector<1x1xf32> -> vector<1x1xf32>
    %c0_6 = arith.constant 0 : index
    %c0_7 = arith.constant 0 : index
    %8 = vector.load %arg3[%c0_6, %c0_7] : memref<1x1xf32, #tpu.memory_space<vmem>>, vector<1x1xf32>
    %9 = arith.addf %7, %8 : vector<1x1xf32>
    %cst_8 = arith.constant 0.000000e+00 : f32
    %10 = vector.broadcast %cst_8 : f32 to vector<1x1xf32>
    %11 = arith.maximumf %9, %10 : vector<1x1xf32>
    %12 = vector.broadcast %cst_8 : f32 to vector<1x1xf32>
    %13 = arith.subf %9, %12 : vector<1x1xf32>
    %14 = arith.cmpf one, %13, %13 : vector<1x1xf32>
    %15 = vector.broadcast %cst_8 : f32 to vector<1x1xf32>
    %16 = arith.addf %9, %15 : vector<1x1xf32>
    %17 = math.absf %13 : vector<1x1xf32>
    %cst_9 = arith.constant 0.000000e+00 : f32
    %18 = vector.broadcast %cst_9 : f32 to vector<1x1xf32>
    %19 = arith.subf %18, %17 : vector<1x1xf32>
    %20 = math.exp %19 : vector<1x1xf32>
    %21 = math.log1p %20 : vector<1x1xf32>
    %22 = arith.addf %11, %21 : vector<1x1xf32>
    %23 = arith.select %14, %16, %22 : vector<1x1xi1>, vector<1x1xf32>
    %24 = math.tanh %23 : vector<1x1xf32>
    %25 = arith.mulf %9, %24 : vector<1x1xf32>
    %c0_10 = arith.constant 0 : index
    %c0_11 = arith.constant 0 : index
    %26 = vector.load %arg4[%c0_10, %c0_11] : memref<4x1xf32, #tpu.memory_space<vmem>>, vector<4x1xf32>
    %cst_12 = arith.constant dense<0.000000e+00> : vector<4x1xf32>
    %27 = tpu.matmul %26, %25, %cst_12 {dimension_numbers = #tpu.dot_dimension_numbers<[1], [0], [0], [1], [0, 0, 1, 1], [], []>} : vector<4x1xf32>, vector<1x1xf32>, vector<4x1xf32> -> vector<4x1xf32>
    %c0_13 = arith.constant 0 : index
    %c0_14 = arith.constant 0 : index
    %28 = vector.load %arg5[%c0_13, %c0_14] : memref<4x1xf32, #tpu.memory_space<vmem>>, vector<4x1xf32>
    %29 = arith.addf %27, %28 : vector<4x1xf32>
    %30 = arith.negf %29 : vector<4x1xf32>
    %31 = math.exp %30 : vector<4x1xf32>
    %cst_15 = arith.constant 1.000000e+00 : f32
    %32 = vector.broadcast %cst_15 : f32 to vector<4x1xf32>
    %33 = arith.addf %32, %31 : vector<4x1xf32>
    %34 = arith.divf %32, %33 : vector<4x1xf32>
    %c0_16 = arith.constant 0 : index
    %c0_17 = arith.constant 0 : index
    %c0_18 = arith.constant 0 : index
    %35 = vector.load %arg1[%c0_16, %c0_17, %c0_18] : memref<1x4x256xf32, #tpu.memory_space<vmem>>, vector<1x4x256xf32>
    %36 = vector.shape_cast %35 : vector<1x4x256xf32> to vector<4x256xf32>
    %37 = vector.broadcast %34 : vector<4x1xf32> to vector<4x256xf32>
    %38 = arith.mulf %36, %37 : vector<4x256xf32>
    %c0_19 = arith.constant 0 : index
    %c0_20 = arith.constant 0 : index
    %c0_21 = arith.constant 0 : index
    %39 = vector.load %arg6[%c0_19, %c0_20, %c0_21] : memref<1x4x256xf32, #tpu.memory_space<vmem>>, vector<1x4x256xf32>
    %40 = vector.shape_cast %39 : vector<1x4x256xf32> to vector<4x256xf32>
    %41 = vector.shape_cast %38 : vector<4x256xf32> to vector<1x4x256xf32>
    tpu.vector_store %arg6[%c0_19, %c0_20, %c0_21], %41 {strides = array<i32>} : memref<1x4x256xf32, #tpu.memory_space<vmem>>, vector<1x4x256xf32>,
    return
  }
  func.func @transform_0(%arg0: i32) -> (i32, i32, i32) {
    %c0_i32 = arith.constant 0 : i32
    %c0_i32_0 = arith.constant 0 : i32
    %c0_i32_1 = arith.constant 0 : i32
    return %arg0, %c0_i32, %c0_i32_0 : i32, i32, i32
  }
  func.func @transform_1(%arg0: i32) -> (i32, i32) {
    %c0_i32 = arith.constant 0 : i32
    %c0_i32_0 = arith.constant 0 : i32
    %c0_i32_1 = arith.constant 0 : i32
    return %c0_i32, %c0_i32_0 : i32, i32
  }
  func.func @transform_2(%arg0: i32) -> (i32, i32) {
    %c0_i32 = arith.constant 0 : i32
    %c0_i32_0 = arith.constant 0 : i32
    %c0_i32_1 = arith.constant 0 : i32
    return %c0_i32, %c0_i32_0 : i32, i32
  }
  func.func @transform_3(%arg0: i32) -> (i32, i32) {
    %c0_i32 = arith.constant 0 : i32
    %c0_i32_0 = arith.constant 0 : i32
    %c0_i32_1 = arith.constant 0 : i32
    return %c0_i32, %c0_i32_0 : i32, i32
  }
  func.func @transform_4(%arg0: i32) -> (i32, i32) {
    %c0_i32 = arith.constant 0 : i32
    %c0_i32_0 = arith.constant 0 : i32
    %c0_i32_1 = arith.constant 0 : i32
    return %c0_i32, %c0_i32_0 : i32, i32
  }
  func.func @transform_5(%arg0: i32) -> (i32, i32, i32) {
    %c0_i32 = arith.constant 0 : i32
    %c0_i32_0 = arith.constant 0 : i32
    %c0_i32_1 = arith.constant 0 : i32
    return %arg0, %c0_i32, %c0_i32_0 : i32, i32, i32
  }
}

</mosaic_0001>

<llo_original>
// kernel: tpu_custom_call.1
$region0: #{tpu_custom_call.1}
  #allocation0 [shape = 'u32[]', space=smem, size = 0x4, offset = 0x4, fixed_abs, tag = 'smem constant byte address 0x4 - core index']
  #allocation1 [shape = 'u32[144,128]{1,0:T(1,128)}', space=vmem, size = 0x12000, scoped, tag = 'internal scratch']
  #allocation2 [shape = 'f32[1,1]{1,0:T(1,128)S(1)}', space=vmem, size = 0x200, scoped, tag = 'scoped memory for tpu_custom_call.1']
  %s0 = inlined_call_operand.hbm [shape: f32[2,4,256], index: 0, kind: input, shape index: {}]
  %s1 = inlined_call_operand.vmem [shape: f32[1,4], index: 1, kind: input, shape index: {}]
  %s2 = inlined_call_operand.<no memory space> [shape: f32[1,1], index: 2, kind: input, shape index: {}]
  %s3 = inlined_call_operand.vmem [shape: f32[4,1], index: 3, kind: input, shape index: {}]
  %s4 = inlined_call_operand.vmem [shape: f32[4,1], index: 4, kind: input, shape index: {}]
  %s5 = inlined_call_operand.hbm [shape: f32[2,4,256], index: 5, kind: output, shape index: {}]
  %s6 = sld [smem:[#allocation0]]
  $region57: #{tpu_custom_call.1} parent=0
    _
  %s8 = ssub.s32 1, %s6
  %s9 = scalar_select 0, %s8, %s6
  %v10 = vstv %s2
  %11 = vst [vmem:[#allocation2] sm:$0x1] %v10
  $region1: #{tpu_custom_call.1} parent=0
    #allocation3 [shape = 'u8[8192]{0}', space=vmem, size = 0x2000, scoped, tag = 'input window, operand 0']
    #allocation4 [shape = 's32[2]{0}', space=sflag, size = 0x8, scoped, tag = 'scoped memory for tpu_custom_call.1']
    #allocation5 [shape = 's32[2]{0}', space=sflag, size = 0x8, scoped, tag = 'scoped memory for tpu_custom_call.1']
    #allocation6 [shape = 'u8[8192]{0}', space=vmem, size = 0x2000, scoped, tag = 'output window, operand 0']
    %12 = vsyncpa [#allocation4], 0
    %s13 = scalar_lea.sflag [#allocation4], 1
    %14 = vsyncpa %s13, 0
    %15 = vsyncpa [#allocation5], 0
    %s16 = scalar_lea.sflag [#allocation5], 1
    %17 = vsyncpa %s16, 0
    loop: start=0, step=1, limit=4
    $region2: #{tpu_custom_call.1} parent=1 // loop_pre_header
      _
    $region3: #{tpu_custom_call.1} parent=1 // loop_header
      %s19 = sphi 0, %s23
      %p20 = scmp.ge.s32.totalorder %s19, 4
      %s29 = sphi 0, %s31
      %s32 = sphi 0, %s29
      %s33 = sphi 0, %s32
      %s49 = sphi 0, %s33
      %s53 = sphi 0, %s53
      %s55 = sphi 0, %s53
      %s56 = sphi 0, %s55
      %s70 = sphi 0, %s56
      %s74 = sphi 0, %s74
      %s76 = sphi 0, %s74
      %s77 = sphi 0, %s76
      %s91 = sphi 0, %s77
      %s95 = sphi 0, %s95
      %s97 = sphi 0, %s95
      %s98 = sphi 0, %s97
      %s112 = sphi 0, %s98
      %s116 = sphi 0, %s116
      %s118 = sphi 0, %s116
      %s119 = sphi 0, %s118
      %s133 = sphi 0, %s119
      %s139 = sphi 0, %s141
      %s142 = sphi 0, %s139
      %s143 = sphi 0, %s142
      %s159 = sphi 0, %s143
    $region4: #{tpu_custom_call.1} parent=1 // loop_header_branch
      %22 = sbr.rel (%p20) target = $region8
    $region5: #{tpu_custom_call.1} parent=1 // loop_body
      %s24 = ssub.s32 %s19, 1
      %s25 = ssub.s32 %s19, 2
      %s26 = sadd.s32 %s19, 1
      %s27 = ssub.s32 %s19, %s26
      %p28 = scmp.eq.s32.totalorder %s27, 0
      %s30 = sadd.s32 %s29, 1
      %s31 = scalar_select %p28, %s29, %s30
      %p34 = pneg %p28
      %p35 = scmp.eq.s32.totalorder %s19, 1
      %p36 = por %p34, %p35
      %p37 = scmp.ne.s32.totalorder %s29, %s32
      %p38 = scmp.eq.s32.totalorder %s19, 0
      %p39 = por %p37, %p38
      %p40 = scmp.ne.s32.totalorder %s29, %s32
      %p41 = scmp.eq.s32.totalorder %s24, 1
      %p42 = por %p40, %p41
      %p43 = scmp.ne.s32.totalorder %s32, %s33
      %p44 = scmp.eq.s32.totalorder %s24, 0
      %p45 = por %p43, %p44
      %p46 = scmp.ne.s32.totalorder %s32, %s33
      %p47 = scmp.eq.s32.totalorder %s25, 1
      %p48 = por %p46, %p47
      %p50 = scmp.ne.s32.totalorder %s33, %s49
      %p51 = scmp.eq.s32.totalorder %s25, 0
      %p52 = por %p50, %p51
      %s54 = sadd.s32 %s53, 1
      %p57 = scmp.eq.s32.totalorder %s19, 1
      %p58 = scmp.ne.s32.totalorder %s53, %s55
      %p59 = scmp.eq.s32.totalorder %s19, 0
      %p60 = por %p58, %p59
      %p61 = scmp.ne.s32.totalorder %s53, %s55
      %p62 = scmp.eq.s32.totalorder %s24, 1
      %p63 = por %p61, %p62
      %p64 = scmp.ne.s32.totalorder %s55, %s56
      %p65 = scmp.eq.s32.totalorder %s24, 0
      %p66 = por %p64, %p65
      %p67 = scmp.ne.s32.totalorder %s55, %s56
      %p68 = scmp.eq.s32.totalorder %s25, 1
      %p69 = por %p67, %p68
      %p71 = scmp.ne.s32.totalorder %s56, %s70
      %p72 = scmp.eq.s32.totalorder %s25, 0
      %p73 = por %p71, %p72
      %s75 = sadd.s32 %s74, 1
      %p78 = scmp.eq.s32.totalorder %s19, 1
      %p79 = scmp.ne.s32.totalorder %s74, %s76
      %p80 = scmp.eq.s32.totalorder %s19, 0
      %p81 = por %p79, %p80
      %p82 = scmp.ne.s32.totalorder %s74, %s76
      %p83 = scmp.eq.s32.totalorder %s24, 1
      %p84 = por %p82, %p83
      %p85 = scmp.ne.s32.totalorder %s76, %s77
      %p86 = scmp.eq.s32.totalorder %s24, 0
      %p87 = por %p85, %p86
      %p88 = scmp.ne.s32.totalorder %s76, %s77
      %p89 = scmp.eq.s32.totalorder %s25, 1
      %p90 = por %p88, %p89
      %p92 = scmp.ne.s32.totalorder %s77, %s91
      %p93 = scmp.eq.s32.totalorder %s25, 0
      %p94 = por %p92, %p93
      %s96 = sadd.s32 %s95, 1
      %p99 = scmp.eq.s32.totalorder %s19, 1
      %p100 = scmp.ne.s32.totalorder %s95, %s97
      %p101 = scmp.eq.s32.totalorder %s19, 0
      %p102 = por %p100, %p101
      %p103 = scmp.ne.s32.totalorder %s95, %s97
      %p104 = scmp.eq.s32.totalorder %s24, 1
      %p105 = por %p103, %p104
      %p106 = scmp.ne.s32.totalorder %s97, %s98
      %p107 = scmp.eq.s32.totalorder %s24, 0
      %p108 = por %p106, %p107
      %p109 = scmp.ne.s32.totalorder %s97, %s98
      %p110 = scmp.eq.s32.totalorder %s25, 1
      %p111 = por %p109, %p110
      %p113 = scmp.ne.s32.totalorder %s98, %s112
      %p114 = scmp.eq.s32.totalorder %s25, 0
      %p115 = por %p113, %p114
      %s117 = sadd.s32 %s116, 1
      %p120 = scmp.eq.s32.totalorder %s19, 1
      %p121 = scmp.ne.s32.totalorder %s116, %s118
      %p122 = scmp.eq.s32.totalorder %s19, 0
      %p123 = por %p121, %p122
      %p124 = scmp.ne.s32.totalorder %s116, %s118
      %p125 = scmp.eq.s32.totalorder %s24, 1
      %p126 = por %p124, %p125
      %p127 = scmp.ne.s32.totalorder %s118, %s119
      %p128 = scmp.eq.s32.totalorder %s24, 0
      %p129 = por %p127, %p128
      %p130 = scmp.ne.s32.totalorder %s118, %s119
      %p131 = scmp.eq.s32.totalorder %s25, 1
      %p132 = por %p130, %p131
      %p134 = scmp.ne.s32.totalorder %s119, %s133
      %p135 = scmp.eq.s32.totalorder %s25, 0
      %p136 = por %p134, %p135
      %s137 = ssub.s32 %s19, %s26
      %p138 = scmp.eq.s32.totalorder %s137, 0
      %s140 = sadd.s32 %s139, 1
      %s141 = scalar_select %p138, %s139, %s140
      %p144 = pneg %p138
      %p145 = scmp.eq.s32.totalorder %s19, 1
      %p146 = por %p144, %p145
      %p147 = scmp.ne.s32.totalorder %s139, %s142
      %p148 = scmp.eq.s32.totalorder %s19, 0
      %p149 = por %p147, %p148
      %p150 = scmp.ne.s32.totalorder %s139, %s142
      %p151 = scmp.eq.s32.totalorder %s24, 1
      %p152 = por %p150, %p151
      %p153 = scmp.ne.s32.totalorder %s142, %s143
      %p154 = scmp.eq.s32.totalorder %s24, 0
      %p155 = por %p153, %p154
      %p156 = scmp.ne.s32.totalorder %s142, %s143
      %p157 = scmp.eq.s32.totalorder %s25, 1
      %p158 = por %p156, %p157
      %p160 = scmp.ne.s32.totalorder %s143, %s159
      %p161 = scmp.eq.s32.totalorder %s25, 0
      %p162 = por %p160, %p161
      %p163 = scmp.le.s32.totalorder 1, %s19
      %p164 = scmp.lt.s32.totalorder %s19, 3
      %p165 = pnand %p163, %p164
      %p166 = pneg %p165
      // Predicated region
      $region9: #{tpu_custom_call.1} parent=5 // pred_check
        _
      $region10: #{tpu_custom_call.1} parent=5 // pred_check_branch
        %168 = sbr.rel (%p165) target = $region12
      $region11: #{tpu_custom_call.1} parent=5 // pred_region
        %s169 = ssub.s32 %s19, 1
        // Predicated region
        $region13: #{tpu_custom_call.1} parent=11 // pred_check
          %p170 = pneg %p66
        $region14: #{tpu_custom_call.1} parent=11 // pred_check_branch
          %172 = sbr.rel (%p170) target = $region16
        $region15: #{tpu_custom_call.1} parent=11 // pred_region
          _
        $region16: #{tpu_custom_call.1} parent=11 // pred_fallthru
          _
        // Predicated region
        $region17: #{tpu_custom_call.1} parent=11 // pred_check
          %p173 = pneg %p87
        $region18: #{tpu_custom_call.1} parent=11 // pred_check_branch
          %175 = sbr.rel (%p173) target = $region20
        $region19: #{tpu_custom_call.1} parent=11 // pred_region
          _
        $region20: #{tpu_custom_call.1} parent=11 // pred_fallthru
          _
        // Predicated region
        $region21: #{tpu_custom_call.1} parent=11 // pred_check
          %p176 = pneg %p108
        $region22: #{tpu_custom_call.1} parent=11 // pred_check_branch
          %178 = sbr.rel (%p176) target = $region24
        $region23: #{tpu_custom_call.1} parent=11 // pred_region
          _
        $region24: #{tpu_custom_call.1} parent=11 // pred_fallthru
          _
        // Predicated region
        $region25: #{tpu_custom_call.1} parent=11 // pred_check
          %p179 = pneg %p129
        $region26: #{tpu_custom_call.1} parent=11 // pred_check_branch
          %181 = sbr.rel (%p179) target = $region28
        $region27: #{tpu_custom_call.1} parent=11 // pred_region
          _
        $region28: #{tpu_custom_call.1} parent=11 // pred_fallthru
          _
      $region12: #{tpu_custom_call.1} parent=5 // pred_fallthru
        _
      %p182 = scmp.lt.s32.totalorder %s19, 2
      // Predicated region
      $region29: #{tpu_custom_call.1} parent=5 // pred_check
        %p183 = pneg %p182
      $region30: #{tpu_custom_call.1} parent=5 // pred_check_branch
        %185 = sbr.rel (%p183) target = $region32
      $region31: #{tpu_custom_call.1} parent=5 // pred_region
        // Predicated region
        $region33: #{tpu_custom_call.1} parent=31 // pred_check
          %p186 = pneg %p39
        $region34: #{tpu_custom_call.1} parent=31 // pred_check_branch
          %188 = sbr.rel (%p186) target = $region36
        $region35: #{tpu_custom_call.1} parent=31 // pred_region
          %s189 = sand.u32 %s29, 1
          %s190 = scalar_lea.sflag [#allocation4], %s189
          %s191 = sand.u32 %s29, 1
          %s192 = smul.addr %s191, 8
          %s193 = scalar_lea.vmem [#allocation3], %s192
          %s195 = ssub.s32 128, 128
          %196 = vsyncadd %s190, %s195
          %s197 = smul.addr %s19, 2
          %s198 = smul.addr %s197, 64
          %s199 = scalar_lea.hbm %s0, %s198
          %s201 = sshll.u32 %s193, 4
          %s202 = int_to_ptr.vmem [resolvable:$true] %s201
          %204 = dma.hbm_to_vmem [thread:$0]  %s199, 128, %s202, %s190
        $region36: #{tpu_custom_call.1} parent=31 // pred_fallthru
          _
      $region32: #{tpu_custom_call.1} parent=5 // pred_fallthru
        _
      %p205 = scmp.le.s32.totalorder 1, %s19
      %p206 = scmp.lt.s32.totalorder %s19, 3
      %p207 = pnand %p205, %p206
      %p208 = pneg %p207
      // Predicated region
      $region37: #{tpu_custom_call.1} parent=5 // pred_check
        _
      $region38: #{tpu_custom_call.1} parent=5 // pred_check_branch
        %210 = sbr.rel (%p207) target = $region40
      $region39: #{tpu_custom_call.1} parent=5 // pred_region
        %s211 = ssub.s32 %s19, 1
        %s212 = sand.u32 %s32, 1
        %s213 = scalar_lea.sflag [#allocation4], %s212
        %s214 = sand.u32 %s32, 1
        %s215 = smul.addr %s214, 8
        %s216 = scalar_lea.vmem [#allocation3], %s215
        // Predicated region
        $region41: #{tpu_custom_call.1} parent=39 // pred_check
          %p217 = pneg %p45
        $region42: #{tpu_custom_call.1} parent=39 // pred_check_branch
          %219 = sbr.rel (%p217) target = $region44
        $region43: #{tpu_custom_call.1} parent=39 // pred_region
          %220 = dma.done %s213, 128
        $region44: #{tpu_custom_call.1} parent=39 // pred_fallthru
          _
        %s221 = sand.u32 %s32, 1
        %s222 = scalar_lea.sflag [#allocation4], %s221
        %s223 = sand.u32 %s32, 1
        %s224 = smul.addr %s223, 8
        %s225 = scalar_lea.vmem [#allocation3], %s224
        %p226 = pneg %p45
        %p227 = pneg %p42
        %p228 = pneg %p66
        %p229 = pneg %p63
        %p230 = pneg %p87
        %p231 = pneg %p84
        %p232 = pneg %p108
        %p233 = pneg %p105
        %p234 = pneg %p129
        %p235 = pneg %p126
        %p236 = pneg %p155
        %p237 = pneg %p152
        %s238 = sand.u32 %s142, 1
        %s239 = scalar_lea.sflag [#allocation5], %s238
        %s240 = sand.u32 %s142, 1
        %s241 = smul.addr %s240, 8
        %s242 = scalar_lea.vmem [#allocation6], %s241
        %v243 = vld [vmem:[%s216] sm:$0xff]
        %v245 = vcombine.high %v243, %v243
        %vm247 = vcmask 1043456
        %v248 = vsel %vm247, %v243, 0.0
        %v249 = vsel %vm247, %v245, 0.0
        %v250 = vadd.f32 %v248, %v249
        %251 = vadd.xlane.f32.xlu0 %v250
        %v252 = vpop.xlane.xlu0 %251
        %v253 = vmul.f32 %v252, 0.00390625
        %v254 = vld [vmem:[%s1] sm:$0x1]
        %v255 = vld [vmem:[#allocation2] sm:$0x1]
        %vm256 = vcmask 31744
        %v258 = vsel %vm256, %v254, 0
        %v261 = vsel %vm247, %v253, 0
        %263 = vmatprep.subr.mxu0 0.0
        %264 = vmatpush1.msra.mxu0 %v261
        %265 = vmatprep.subr.mxu0 0.0
        %266 = vmatpush1.msra.mxu0 0.0
        %267 = vmatprep.subr.mxu0 0.0
        %268 = vmatpush1.msra.mxu0 0.0
        %269 = vmatprep.subr.mxu0 0.0
        %270 = vmatpush1.msra.mxu0 0.0
        %271 = vmatprep.subr.mxu0 0.0
        %272 = vmatpush1.msra.mxu0 0.0
        %273 = vmatprep.subr.mxu0 0.0
        %274 = vmatpush1.msra.mxu0 0.0
        %275 = vmatprep.subr.mxu0 0.0
        %276 = vmatpush1.msra.mxu0 0.0
        %277 = vmatprep.subr.mxu0 0.0
        %278 = vmatpush1.msra.mxu0 0.0
        %279 = vmatprep.subr.mxu0 0.0
        %280 = vmatpush1.msra.mxu0 0.0
        %281 = vmatprep.subr.mxu0 0.0
        %282 = vmatpush1.msra.mxu0 0.0
        %283 = vmatprep.subr.mxu0 0.0
        %284 = vmatpush1.msra.mxu0 0.0
        %285 = vmatprep.subr.mxu0 0.0
        %286 = vmatpush1.msra.mxu0 0.0
        %287 = vmatprep.subr.mxu0 0.0
        %288 = vmatpush1.msra.mxu0 0.0
        %289 = vmatprep.subr.mxu0 0.0
        %290 = vmatpush1.msra.mxu0 0.0
        %291 = vmatprep.subr.mxu0 0.0
        %292 = vmatpush1.msra.mxu0 0.0
        %293 = vmatprep.subr.mxu0 0.0
        %294 = vmatpush1.msra.mxu0 0.0
        %295 = vmatprep.subr.mxu0 0.0
        %296 = vmatpush1.msra.mxu0 0.0
        %297 = vmatprep.subr.mxu0 0.0
        %298 = vmatpush1.msra.mxu0 0.0
        %299 = vmatprep.subr.mxu0 0.0
        %300 = vmatpush1.msra.mxu0 0.0
        %301 = vmatprep.subr.mxu0 0.0
        %302 = vmatpush1.msra.mxu0 0.0
        %303 = vmatprep.subr.mxu0 0.0
        %304 = vmatpush1.msra.mxu0 0.0
        %305 = vmatprep.subr.mxu0 0.0
        %306 = vmatpush1.msra.mxu0 0.0
        %307 = vmatprep.subr.mxu0 0.0
        %308 = vmatpush1.msra.mxu0 0.0
        %309 = vmatprep.subr.mxu0 0.0
        %310 = vmatpush1.msra.mxu0 0.0
        %311 = vmatprep.subr.mxu0 0.0
        %312 = vmatpush1.msra.mxu0 0.0
        %313 = vmatprep.subr.mxu0 0.0
        %314 = vmatpush1.msra.mxu0 0.0
        %315 = vmatprep.subr.mxu0 0.0
        %316 = vmatpush1.msra.mxu0 0.0
        %317 = vmatprep.subr.mxu0 0.0
        %318 = vmatpush1.msra.mxu0 0.0
        %319 = vmatprep.subr.mxu0 0.0
        %320 = vmatpush1.msra.mxu0 0.0
        %321 = vmatprep.subr.mxu0 0.0
        %322 = vmatpush1.msra.mxu0 0.0
        %323 = vmatprep.subr.mxu0 0.0
        %324 = vmatpush1.msra.mxu0 0.0
        %325 = vmatprep.subr.mxu0 0.0
        %326 = vmatpush1.msra.mxu0 0.0
        %327 = vmatprep.mubr.f32.mxu0 0.0
        %328 = vmatmul.mubr.f32.gmra.mrb[0].mxu0 %v258
        %v329 = vpop.f32.mrb[0].mxu0
        %v330 = vadd.f32 %v255, %v329
        %v331 = vpop.f32.mrb[0].mxu0
        %332 = vdwg.mxu0
        %v333 = vmax.f32 %v330, 0.0
        %vm334 = vcmp.ne.f32.partialorder %v330, %v330
        %v335 = vadd.f32 %v330, 0.0
        %v336 = vand.u32 2147483647, %v330
        %v337 = vsub.f32 0.0, %v336
        %v338 = vmul.f32 %v337, 1.442695
        %v339 = vpow.pop %v338
        %v340 = vadd.f32 %v339, 1.0
        %v341 = vlog2.pop %v340
        %v342 = vmul.f32 %v341, 0.6931472
        %v343 = vmul.f32 -0.5, %v339
        %v344 = vadd.f32 %v343, 1.0
        %v345 = vmul.f32 %v344, %v339
        %v346 = vand.u32 2147483647, %v339
        %vm347 = vcmp.lt.f32.partialorder %v346, 0.0004427343
        %v348 = vsel %vm347, %v345, %v342
        %v349 = vadd.f32 %v333, %v348
        %v350 = vsel %vm334, %v335, %v349
        %v351 = vtanh.pop %v350
        %v352 = vmul.f32 %v330, %v351
        %v353 = vld [vmem:[%s3] sm:$0xf]
        %v354 = vld [vmem:[%s4] sm:$0xf]
        %vm355 = vcmask 7168
        %v357 = vsel %vm355, %v353, 0
        %vm359 = vcmask 1040384
        %v361 = vsel %vm359, %v352, 0
        %363 = vmatprep.subr.mxu0 0.0
        %364 = vmatpush1.msra.mxu0 %v361
        %365 = vmatprep.subr.mxu0 0.0
        %366 = vmatpush1.msra.mxu0 0.0
        %367 = vmatprep.subr.mxu0 0.0
        %368 = vmatpush1.msra.mxu0 0.0
        %369 = vmatprep.subr.mxu0 0.0
        %370 = vmatpush1.msra.mxu0 0.0
        %371 = vmatprep.subr.mxu0 0.0
        %372 = vmatpush1.msra.mxu0 0.0
        %373 = vmatprep.subr.mxu0 0.0
        %374 = vmatpush1.msra.mxu0 0.0
        %375 = vmatprep.subr.mxu0 0.0
        %376 = vmatpush1.msra.mxu0 0.0
        %377 = vmatprep.subr.mxu0 0.0
        %378 = vmatpush1.msra.mxu0 0.0
        %379 = vmatprep.subr.mxu0 0.0
        %380 = vmatpush1.msra.mxu0 0.0
        %381 = vmatprep.subr.mxu0 0.0
        %382 = vmatpush1.msra.mxu0 0.0
        %383 = vmatprep.subr.mxu0 0.0
        %384 = vmatpush1.msra.mxu0 0.0
        %385 = vmatprep.subr.mxu0 0.0
        %386 = vmatpush1.msra.mxu0 0.0
        %387 = vmatprep.subr.mxu0 0.0
        %388 = vmatpush1.msra.mxu0 0.0
        %389 = vmatprep.subr.mxu0 0.0
        %390 = vmatpush1.msra.mxu0 0.0
        %391 = vmatprep.subr.mxu0 0.0
        %392 = vmatpush1.msra.mxu0 0.0
        %393 = vmatprep.subr.mxu0 0.0
        %394 = vmatpush1.msra.mxu0 0.0
        %395 = vmatprep.subr.mxu0 0.0
        %396 = vmatpush1.msra.mxu0 0.0
        %397 = vmatprep.subr.mxu0 0.0
        %398 = vmatpush1.msra.mxu0 0.0
        %399 = vmatprep.subr.mxu0 0.0
        %400 = vmatpush1.msra.mxu0 0.0
        %401 = vmatprep.subr.mxu0 0.0
        %402 = vmatpush1.msra.mxu0 0.0
        %403 = vmatprep.subr.mxu0 0.0
        %404 = vmatpush1.msra.mxu0 0.0
        %405 = vmatprep.subr.mxu0 0.0
        %406 = vmatpush1.msra.mxu0 0.0
        %407 = vmatprep.subr.mxu0 0.0
        %408 = vmatpush1.msra.mxu0 0.0
        %409 = vmatprep.subr.mxu0 0.0
        %410 = vmatpush1.msra.mxu0 0.0
        %411 = vmatprep.subr.mxu0 0.0
        %412 = vmatpush1.msra.mxu0 0.0
        %413 = vmatprep.subr.mxu0 0.0
        %414 = vmatpush1.msra.mxu0 0.0
        %415 = vmatprep.subr.mxu0 0.0
        %416 = vmatpush1.msra.mxu0 0.0
        %417 = vmatprep.subr.mxu0 0.0
        %418 = vmatpush1.msra.mxu0 0.0
        %419 = vmatprep.subr.mxu0 0.0
        %420 = vmatpush1.msra.mxu0 0.0
        %421 = vmatprep.subr.mxu0 0.0
        %422 = vmatpush1.msra.mxu0 0.0
        %423 = vmatprep.subr.mxu0 0.0
        %424 = vmatpush1.msra.mxu0 0.0
        %425 = vmatprep.subr.mxu0 0.0
        %426 = vmatpush1.msra.mxu0 0.0
        %427 = vmatprep.mubr.f32.mxu0 0.0
        %428 = vmatmul.mubr.f32.gmra.mrb[0].mxu0 %v357
        %v429 = vpop.f32.mrb[0].mxu0
        %v430 = vadd.f32 %v354, %v429
        %v431 = vpop.f32.mrb[0].mxu0
        %432 = vdwg.mxu0
        %v433 = vxor.u32 %v430, 2147483648
        %v434 = vmul.f32 %v433, 1.442695
        %v435 = vpow.pop %v434
        %v436 = vadd.f32 %v435, 1.0
        %v437 = vrcp.pop %v436
        %v438 = vmul.f32 1.0, %v437
        %440 = vset.pattern.permute.xlu0 0
        %441 = vperm.xlu0 %440, %v438
        %v442 = vpop.permute.xlu0 %441
        %v444 = vunpack.c.l.s4 839922192
        %v445 = vunpack.c.0.s8 %v444
        %v446 = vlaneseq
        %v447 = vshrl.u32 %v446, 7
        %v448 = vsub.s32 %v445, %v447
        %v449 = vrot.slane %v442, %v448
        %v451 = vmul.f32 %v243, %v449
        %452 = vst [vmem:[%s242] sm:$0xff] %v451
        %s453 = sand.u32 %s142, 1
        %s454 = scalar_lea.sflag [#allocation5], %s453
        %s455 = sand.u32 %s142, 1
        %s456 = smul.addr %s455, 8
        %s457 = scalar_lea.vmem [#allocation6], %s456
        // Predicated region
        $region45: #{tpu_custom_call.1} parent=39 // pred_check
          %p458 = pneg %p152
        $region46: #{tpu_custom_call.1} parent=39 // pred_check_branch
          %460 = sbr.rel (%p458) target = $region48
        $region47: #{tpu_custom_call.1} parent=39 // pred_region
          %s462 = ssub.s32 128, 128
          %463 = vsyncadd %s454, %s462
          %s464 = smul.addr %s24, 2
          %s465 = smul.addr %s464, 64
          %s466 = scalar_lea.hbm %s5, %s465
          %s468 = sshll.u32 %s457, 4
          %s469 = int_to_ptr.vmem [resolvable:$true] %s468
          %471 = dma.vmem_to_hbm [thread:$0]  %s469, 128, %s466, %s454
        $region48: #{tpu_custom_call.1} parent=39 // pred_fallthru
          _
      $region40: #{tpu_custom_call.1} parent=5 // pred_fallthru
        _
      %p472 = scmp.le.s32.totalorder 2, %s19
      // Predicated region
      $region49: #{tpu_custom_call.1} parent=5 // pred_check
        %p473 = pneg %p472
      $region50: #{tpu_custom_call.1} parent=5 // pred_check_branch
        %475 = sbr.rel (%p473) target = $region52
      $region51: #{tpu_custom_call.1} parent=5 // pred_region
        %s476 = ssub.s32 %s19, 2
        // Predicated region
        $region53: #{tpu_custom_call.1} parent=51 // pred_check
          %p477 = pneg %p158
        $region54: #{tpu_custom_call.1} parent=51 // pred_check_branch
          %479 = sbr.rel (%p477) target = $region56
        $region55: #{tpu_custom_call.1} parent=51 // pred_region
          %s480 = sand.u32 %s143, 1
          %s481 = scalar_lea.sflag [#allocation5], %s480
          %s482 = sand.u32 %s143, 1
          %s483 = smul.addr %s482, 8
          %s484 = scalar_lea.vmem [#allocation6], %s483
          %485 = dma.done %s481, 128
        $region56: #{tpu_custom_call.1} parent=51 // pred_fallthru
          _
      $region52: #{tpu_custom_call.1} parent=5 // pred_fallthru
        _
    $region6: #{tpu_custom_call.1} parent=1 // loop_footer
      %s23 = sadd.s32 1, %s19
    $region7: #{tpu_custom_call.1} parent=1 // loop_footer_branch
      %18 = sbr.rel target = $region3
    $region8: #{tpu_custom_call.1} parent=1 // loop_exit
      _
    %486 = vsyncpa [#allocation4], 1
    %s487 = scalar_lea.sflag [#allocation4], 1
    %488 = vsyncpa %s487, 1
    %489 = vsyncpa [#allocation5], 1
    %s490 = scalar_lea.sflag [#allocation5], 1
    %491 = vsyncpa %s490, 1

</llo_original>
